<compile_context>
chip_gen: v7x
topology: tpu7x:2x2x1
jax: 0.10.0
libtpu: 0.0.40
codegen_flags: <defaults>
</compile_context>

<pallas_src>
import functools

import jax
import jax.numpy as jnp
from jax.experimental import pallas as pl
from jax.experimental.pallas import tpu as pltpu

EPS = 1e-5


def resblock_kernel(x_ref, wb1_ref, wb2_ref, o_ref, pad_ref, *, C):
    # x_ref / o_ref : (B, H, W*C) f32   -- B images, lane-dense flattening of NHWC rows
    # wb*_ref       : (3, W*C, W*C) bf16 -- per-vertical-tap block-Toeplitz weights
    # pad_ref       : (B, H+2, W*C) f32  -- vertical-halo-only zero-padded scratch
    B, H, WC = x_ref.shape
    W = WC // C
    inv_hw = 1.0 / (H * W)

    # Zero ONLY the 2 vertical halo rows per image, every grid step (each TensorCore
    # owns its own scratch under the parallel grid axis, so no one-time init).
    zrow = jnp.zeros((B, 1, WC), jnp.float32)
    pad_ref[:, 0:1, :] = zrow
    pad_ref[:, H + 1:H + 2, :] = zrow

    x = x_ref[...]                                       # (B, H, W*C) lane-dense load

    def conv3x3(img, wb_ref):
        # Lane-aligned interior write; halo rows already zero.
        pad_ref[:, 1:H + 1, :] = img
        p = pad_ref[...].astype(jnp.bfloat16)            # one small bf16 cast per conv

        def tap(dy):                                     # full-lane row-shifted LHS slab
            return p[:, dy:dy + H, :].reshape(B * H, WC)

        # 3 MXU matmuls, K = N = W*C; width zero-padding lives in the band structure.
        y = jnp.dot(tap(0), wb_ref[0], preferred_element_type=jnp.float32)
        y = y + jnp.dot(tap(1), wb_ref[1], preferred_element_type=jnp.float32)
        y = y + jnp.dot(tap(2), wb_ref[2], preferred_element_type=jnp.float32)
        return y.reshape(B, H, WC)                       # tile-aligned (free) reshape

    def chan_sum(y):
        # Per-(image, channel) sum over HxW kept lane-dense: log2(W) circular lane
        # rolls by multiples of C (XLU slot) reduce over the W positions inside each
        # row; one sublane reduce over H finishes the job.  Result (B, 1, W*C) is
        # already broadcast across lanes for every channel.  Requires power-of-two W.
        s = y.reshape(B * H, WC)
        shift = C
        while shift < WC:
            s = s + pltpu.roll(s, shift=shift, axis=1)
            shift *= 2
        return jnp.sum(s.reshape(B, H, WC), axis=1, keepdims=True)

    def instance_norm(y):
        mean = chan_sum(y) * inv_hw
        yc = y - mean                                    # hoisted, reused below
        var = chan_sum(yc * yc) * inv_hw                 # biased variance (PyTorch IN)
        return yc * jax.lax.rsqrt(var + EPS)

    h = jnp.maximum(instance_norm(conv3x3(x, wb1_ref)), 0.0)    # conv1 + IN + ReLU
    h = instance_norm(conv3x3(h, wb2_ref))                      # conv2 + IN
    o_ref[...] = h + x                                          # residual add


def _banded_weights(w9, W, C):
    """Pack a 3x3 conv weight (9, Cin, Cout), tap index = 3*ky + kx, into 3
    block-Toeplitz matrices Wband[ky] of shape (W*C, W*C):
        Wband[ky][w_in*C + ci, w_out*C + co] = w[ky, w_in - w_out + 1, ci, co]
    (zero outside the band), so a 3x3 conv over a vertically zero-padded image becomes
        out[h] = sum_ky pad[h + ky] @ Wband[ky].
    Host-side setup; Wband bytes scale as 3*(W*C)^2, intended for small W*C.
    """
    w = jnp.asarray(w9, jnp.float32).reshape(3, 3, C, C)        # (ky, kx, ci, co)
    d = jnp.arange(W)[:, None] - jnp.arange(W)[None, :] + 1     # w_in - w_out + 1
    in_band = ((d >= 0) & (d <= 2)).astype(jnp.float32)         # (W, W)
    kx = jnp.clip(d, 0, 2)                                      # (W, W)
    wb = w[:, kx] * in_band[None, :, :, None, None]             # (3, Wi, Wo, Ci, Co)
    wb = jnp.transpose(wb, (0, 1, 3, 2, 4))                     # (3, Wi, Ci, Wo, Co)
    return wb.reshape(3, W * C, W * C).astype(jnp.bfloat16)


def res_block_nhwc(x_nhwc, w1, w2, *, batch_block=None):
    """x_nhwc: (N,H,W,C) f32; w1/w2: (9, Cin, Cout) 3x3 taps (tap index = 3*ky + kx)."""
    N, H, W, C = x_nhwc.shape
    assert W & (W - 1) == 0, "roll-based instance-norm reduction needs power-of-two W"
    # TODO(synk): add a masked-roll (or identity-matmul) fallback for non-power-of-2 W.
    WC = W * C

    if batch_block is None:
        # Largest divisor of N up to 8: amortizes per-step overhead and enlarges DMAs.
        # (On v7x megacore, prefer a B such that N // B stays even when N allows it.)
        batch_block = max(b for b in range(1, min(N, 8) + 1) if N % b == 0)
    B = batch_block
    assert N % B == 0

    wb1 = _banded_weights(w1, W, C)                     # (3, W*C, W*C) bf16
    wb2 = _banded_weights(w2, W, C)
    x2 = x_nhwc.reshape(N, H, WC).astype(jnp.float32)   # free reshape -> lane-dense rows

    # VMEM budget derived from actual buffers (double-buffered I/O blocks + weights
    # + padded scratch) with generous headroom; capped well below v7x's 64 MiB/TC.
    io_block = B * H * WC * 4
    w_bytes = 2 * 3 * WC * WC * 2
    scratch_bytes = B * (H + 2) * WC * 4
    vmem_needed = 2 * 2 * io_block + 2 * w_bytes + scratch_bytes
    vmem_limit = int(min(48 * 1024 * 1024, max(8 * 1024 * 1024, 4 * vmem_needed)))

    out = pl.pallas_call(
        functools.partial(resblock_kernel, C=C),
        out_shape=jax.ShapeDtypeStruct((N, H, WC), jnp.float32),
        grid=(N // B,),
        in_specs=[
            pl.BlockSpec((B, H, WC), lambda n: (n, 0, 0)),
            pl.BlockSpec((3, WC, WC), lambda n: (0, 0, 0)),
            pl.BlockSpec((3, WC, WC), lambda n: (0, 0, 0)),
        ],
        out_specs=pl.BlockSpec((B, H, WC), lambda n: (n, 0, 0)),
        scratch_shapes=[pltpu.VMEM((B, H + 2, WC), jnp.float32)],
        compiler_params=pltpu.CompilerParams(
            dimension_semantics=("parallel",),          # batch blocks shard over TCs
            vmem_limit_bytes=vmem_limit,
        ),
    )(x2, wb1, wb2)
    return out.reshape(N, H, W, C)


def res_block(x_nchw, w1, b1, w2, b2):
    """PyTorch-convention entry: x (N,C,H,W). b1/b2 accepted for API parity but unused
    (they are exact no-ops under the affine-free InstanceNorm following each conv)."""
    # TODO(synk): accept/return NHWC end-to-end in production; the two transposes below
    # re-read/write the whole tensor in HBM and can cost more than the kernel itself.
    del b1, b2
    x = jnp.transpose(x_nchw, (0, 2, 3, 1)).astype(jnp.float32)
    out = res_block_nhwc(x, w1, w2)
    return jnp.transpose(out, (0, 3, 1, 2))


# ---------------- pure-JAX reference (with biases, f32) for correctness check --------
def _ref_resblock(x_nchw, w1, b1, w2, b2):
    x = jnp.transpose(x_nchw, (0, 2, 3, 1)).astype(jnp.float32)
    N, H, W, C = x.shape

    def conv(inp, w9, b):
        w_hwio = w9.reshape(3, 3, C, C)
        y = jax.lax.conv_general_dilated(
            inp, w_hwio, window_strides=(1, 1), padding=((1, 1), (1, 1)),
            dimension_numbers=("NHWC", "HWIO", "NHWC"))
        return y + b.reshape(1, 1, 1, C)

    def inorm(y):
        m = jnp.mean(y, axis=(1, 2), keepdims=True)
        v = jnp.mean((y - m) ** 2, axis=(1, 2), keepdims=True)
        return (y - m) * jax.lax.rsqrt(v + EPS)

    h = jnp.maximum(inorm(conv(x, w1, b1)), 0.0)
    h = inorm(conv(h, w2, b2))
    return jnp.transpose(h + x, (0, 3, 1, 2))


if __name__ == "__main__":
    N, C, H, W = 2, 8, 16, 16  # dim = 8; W*C = 128 -> lane-dense kernel rows
    key = jax.random.PRNGKey(0)
    kx, k1, k2, kb1, kb2 = jax.random.split(key, 5)

    x = jax.random.normal(kx, (N, C, H, W), dtype=jnp.float32)
    std = (2.0 / (C * 9)) ** 0.5
    w1 = std * jax.random.normal(k1, (9, C, C), dtype=jnp.float32)
    w2 = std * jax.random.normal(k2, (9, C, C), dtype=jnp.float32)
    b1 = 0.1 * jax.random.normal(kb1, (C,), dtype=jnp.float32)
    b2 = 0.1 * jax.random.normal(kb2, (C,), dtype=jnp.float32)

    out = jax.block_until_ready(res_block(x, w1, b1, w2, b2))
    ref = jax.block_until_ready(_ref_resblock(x, w1, b1, w2, b2))

    assert out.shape == (N, C, H, W)
    assert bool(jnp.all(jnp.isfinite(out)))
    # Tolerance loosened vs. pure-f32 because MXU operands are bf16; statistics and
    # all elementwise math remain f32.
    assert bool(jnp.allclose(out, ref, atol=5e-2, rtol=5e-2)), "mismatch vs reference"
    print("KERNEL_OK")
</pallas_src>

<mosaic_0001>
module attributes {stable_mosaic.version = 11 : i64} {
  func.func @resblock_kernel(%arg0: i32, %arg1: memref<2x16x128xf32, #tpu.memory_space<vmem>>, %arg2: memref<3x128x128xbf16, #tpu.memory_space<vmem>>, %arg3: memref<3x128x128xbf16, #tpu.memory_space<vmem>>, %arg4: memref<2x16x128xf32, #tpu.memory_space<vmem>>, %arg5: memref<2x18x128xf32, #tpu.memory_space<vmem>>) attributes {dimension_semantics = [#tpu.dimension_semantics<parallel>], iteration_bounds = array<i64: 1>, scalar_prefetch = 0 : i64, scratch_operands = 1 : i64, tpu.core_type = #tpu.core_type<tc>, window_params = [{transform_indices = @transform_0, window_bounds = array<i64: 2, 16, 128>}, {pipeline_mode = #tpu.pipeline_mode<synchronous>, transform_indices = @transform_1, window_bounds = array<i64: 3, 128, 128>}, {pipeline_mode = #tpu.pipeline_mode<synchronous>, transform_indices = @transform_2, window_bounds = array<i64: 3, 128, 128>}, {transform_indices = @transform_3, window_bounds = array<i64: 2, 16, 128>}]} {
    %cst = arith.constant 0.000000e+00 : f32
    %0 = vector.broadcast %cst : f32 to vector<2x1x128xf32>
    %c0 = arith.constant 0 : index
    %c0_0 = arith.constant 0 : index
    %c0_1 = arith.constant 0 : index
    %1 = vector.load %arg5[%c0, %c0_0, %c0_1] : memref<2x18x128xf32, #tpu.memory_space<vmem>>, vector<2x1x128xf32>
    tpu.vector_store %arg5[%c0, %c0_0, %c0_1], %0 {strides = array<i32>} : memref<2x18x128xf32, #tpu.memory_space<vmem>>, vector<2x1x128xf32>,
    %c0_2 = arith.constant 0 : index
    %c17 = arith.constant 17 : index
    %c0_3 = arith.constant 0 : index
    %2 = vector.load %arg5[%c0_2, %c17, %c0_3] : memref<2x18x128xf32, #tpu.memory_space<vmem>>, vector<2x1x128xf32>
    tpu.vector_store %arg5[%c0_2, %c17, %c0_3], %0 {strides = array<i32>} : memref<2x18x128xf32, #tpu.memory_space<vmem>>, vector<2x1x128xf32>,
    %c0_4 = arith.constant 0 : index
    %c0_5 = arith.constant 0 : index
    %c0_6 = arith.constant 0 : index
    %3 = vector.load %arg1[%c0_4, %c0_5, %c0_6] : memref<2x16x128xf32, #tpu.memory_space<vmem>>, vector<2x16x128xf32>
    %c0_7 = arith.constant 0 : index
    %c1 = arith.constant 1 : index
    %c0_8 = arith.constant 0 : index
    %4 = vector.load %arg5[%c0_7, %c1, %c0_8] : memref<2x18x128xf32, #tpu.memory_space<vmem>>, vector<2x16x128xf32>
    tpu.vector_store %arg5[%c0_7, %c1, %c0_8], %3 {strides = array<i32>} : memref<2x18x128xf32, #tpu.memory_space<vmem>>, vector<2x16x128xf32>,
    %c0_9 = arith.constant 0 : index
    %c0_10 = arith.constant 0 : index
    %c0_11 = arith.constant 0 : index
    %5 = vector.load %arg5[%c0_9, %c0_10, %c0_11] : memref<2x18x128xf32, #tpu.memory_space<vmem>>, vector<2x18x128xf32>
    %6 = arith.truncf %5 : vector<2x18x128xf32> to vector<2x18x128xbf16>
    %7 = vector.extract_strided_slice %6 {offsets = [0, 0, 0], sizes = [2, 16, 128], strides = [1, 1, 1]} : vector<2x18x128xbf16> to vector<2x16x128xbf16>
    %8 = vector.shape_cast %7 : vector<2x16x128xbf16> to vector<32x128xbf16>
    %c0_12 = arith.constant 0 : index
    %c0_13 = arith.constant 0 : index
    %c0_14 = arith.constant 0 : index
    %9 = vector.load %arg2[%c0_12, %c0_13, %c0_14] : memref<3x128x128xbf16, #tpu.memory_space<vmem>>, vector<1x128x128xbf16>
    %10 = vector.shape_cast %9 : vector<1x128x128xbf16> to vector<128x128xbf16>
    %cst_15 = arith.constant dense<0.000000e+00> : vector<32x128xf32>
    %11 = tpu.matmul %8, %10, %cst_15 {dimension_numbers = #tpu.dot_dimension_numbers<[1], [0], [0], [1], [0, 0, 1, 1], [], []>} : vector<32x128xbf16>, vector<128x128xbf16>, vector<32x128xf32> -> vector<32x128xf32>
    %12 = vector.extract_strided_slice %6 {offsets = [0, 1, 0], sizes = [2, 16, 128], strides = [1, 1, 1]} : vector<2x18x128xbf16> to vector<2x16x128xbf16>
    %13 = vector.shape_cast %12 : vector<2x16x128xbf16> to vector<32x128xbf16>
    %c1_16 = arith.constant 1 : index
    %c0_17 = arith.constant 0 : index
    %c0_18 = arith.constant 0 : index
    %14 = vector.load %arg2[%c1_16, %c0_17, %c0_18] : memref<3x128x128xbf16, #tpu.memory_space<vmem>>, vector<1x128x128xbf16>
    %15 = vector.shape_cast %14 : vector<1x128x128xbf16> to vector<128x128xbf16>
    %cst_19 = arith.constant dense<0.000000e+00> : vector<32x128xf32>
    %16 = tpu.matmul %13, %15, %cst_19 {dimension_numbers = #tpu.dot_dimension_numbers<[1], [0], [0], [1], [0, 0, 1, 1], [], []>} : vector<32x128xbf16>, vector<128x128xbf16>, vector<32x128xf32> -> vector<32x128xf32>
    %17 = arith.addf %11, %16 : vector<32x128xf32>
    %18 = vector.extract_strided_slice %6 {offsets = [0, 2, 0], sizes = [2, 16, 128], strides = [1, 1, 1]} : vector<2x18x128xbf16> to vector<2x16x128xbf16>
    %19 = vector.shape_cast %18 : vector<2x16x128xbf16> to vector<32x128xbf16>
    %c2 = arith.constant 2 : index
    %c0_20 = arith.constant 0 : index
    %c0_21 = arith.constant 0 : index
    %20 = vector.load %arg2[%c2, %c0_20, %c0_21] : memref<3x128x128xbf16, #tpu.memory_space<vmem>>, vector<1x128x128xbf16>
    %21 = vector.shape_cast %20 : vector<1x128x128xbf16> to vector<128x128xbf16>
    %cst_22 = arith.constant dense<0.000000e+00> : vector<32x128xf32>
    %22 = tpu.matmul %19, %21, %cst_22 {dimension_numbers = #tpu.dot_dimension_numbers<[1], [0], [0], [1], [0, 0, 1, 1], [], []>} : vector<32x128xbf16>, vector<128x128xbf16>, vector<32x128xf32> -> vector<32x128xf32>
    %23 = arith.addf %17, %22 : vector<32x128xf32>
    %24 = vector.shape_cast %23 : vector<32x128xf32> to vector<2x16x128xf32>
    %25 = vector.shape_cast %24 : vector<2x16x128xf32> to vector<32x128xf32>
    %c8_i32 = arith.constant 8 : i32
    %26 = tpu.dynamic_rotate %25 by %c8_i32 dim 1 : vector<32x128xf32>, i32 -> vector<32x128xf32>
    %27 = arith.addf %25, %26 : vector<32x128xf32>
    %c16_i32 = arith.constant 16 : i32
    %28 = tpu.dynamic_rotate %27 by %c16_i32 dim 1 : vector<32x128xf32>, i32 -> vector<32x128xf32>
    %29 = arith.addf %27, %28 : vector<32x128xf32>
    %c32_i32 = arith.constant 32 : i32
    %30 = tpu.dynamic_rotate %29 by %c32_i32 dim 1 : vector<32x128xf32>, i32 -> vector<32x128xf32>
    %31 = arith.addf %29, %30 : vector<32x128xf32>
    %c64_i32 = arith.constant 64 : i32
    %32 = tpu.dynamic_rotate %31 by %c64_i32 dim 1 : vector<32x128xf32>, i32 -> vector<32x128xf32>
    %33 = arith.addf %31, %32 : vector<32x128xf32>
    %34 = vector.shape_cast %33 : vector<32x128xf32> to vector<2x16x128xf32>
    %cst_23 = arith.constant dense<0.000000e+00> : vector<2x128xf32>
    %35 = vector.multi_reduction <add>, %34, %cst_23 [1] : vector<2x16x128xf32> to vector<2x128xf32>
    %36 = vector.shape_cast %35 : vector<2x128xf32> to vector<2x1x128xf32>
    %cst_24 = arith.constant 3.906250e-03 : f32
    %37 = vector.broadcast %cst_24 : f32 to vector<2x1x128xf32>
    %38 = arith.mulf %36, %37 : vector<2x1x128xf32>
    %39 = vector.broadcast %38 : vector<2x1x128xf32> to vector<2x16x128xf32>
    %40 = arith.subf %24, %39 : vector<2x16x128xf32>
    %41 = arith.mulf %40, %40 : vector<2x16x128xf32>
    %42 = vector.shape_cast %41 : vector<2x16x128xf32> to vector<32x128xf32>
    %c8_i32_25 = arith.constant 8 : i32
    %43 = tpu.dynamic_rotate %42 by %c8_i32_25 dim 1 : vector<32x128xf32>, i32 -> vector<32x128xf32>
    %44 = arith.addf %42, %43 : vector<32x128xf32>
    %c16_i32_26 = arith.constant 16 : i32
    %45 = tpu.dynamic_rotate %44 by %c16_i32_26 dim 1 : vector<32x128xf32>, i32 -> vector<32x128xf32>
    %46 = arith.addf %44, %45 : vector<32x128xf32>
    %c32_i32_27 = arith.constant 32 : i32
    %47 = tpu.dynamic_rotate %46 by %c32_i32_27 dim 1 : vector<32x128xf32>, i32 -> vector<32x128xf32>
    %48 = arith.addf %46, %47 : vector<32x128xf32>
    %c64_i32_28 = arith.constant 64 : i32
    %49 = tpu.dynamic_rotate %48 by %c64_i32_28 dim 1 : vector<32x128xf32>, i32 -> vector<32x128xf32>
    %50 = arith.addf %48, %49 : vector<32x128xf32>
    %51 = vector.shape_cast %50 : vector<32x128xf32> to vector<2x16x128xf32>
    %cst_29 = arith.constant dense<0.000000e+00> : vector<2x128xf32>
    %52 = vector.multi_reduction <add>, %51, %cst_29 [1] : vector<2x16x128xf32> to vector<2x128xf32>
    %53 = vector.shape_cast %52 : vector<2x128xf32> to vector<2x1x128xf32>
    %cst_30 = arith.constant 3.906250e-03 : f32
    %54 = vector.broadcast %cst_30 : f32 to vector<2x1x128xf32>
    %55 = arith.mulf %53, %54 : vector<2x1x128xf32>
    %cst_31 = arith.constant 9.99999974E-6 : f32
    %56 = vector.broadcast %cst_31 : f32 to vector<2x1x128xf32>
    %57 = arith.addf %55, %56 : vector<2x1x128xf32>
    %58 = math.rsqrt %57 : vector<2x1x128xf32>
    %59 = vector.broadcast %58 : vector<2x1x128xf32> to vector<2x16x128xf32>
    %60 = arith.mulf %40, %59 : vector<2x16x128xf32>
    %cst_32 = arith.constant 0.000000e+00 : f32
    %61 = vector.broadcast %cst_32 : f32 to vector<2x16x128xf32>
    %62 = arith.maximumf %60, %61 : vector<2x16x128xf32>
    %c0_33 = arith.constant 0 : index
    %c1_34 = arith.constant 1 : index
    %c0_35 = arith.constant 0 : index
    %63 = vector.load %arg5[%c0_33, %c1_34, %c0_35] : memref<2x18x128xf32, #tpu.memory_space<vmem>>, vector<2x16x128xf32>
    tpu.vector_store %arg5[%c0_33, %c1_34, %c0_35], %62 {strides = array<i32>} : memref<2x18x128xf32, #tpu.memory_space<vmem>>, vector<2x16x128xf32>,
    %c0_36 = arith.constant 0 : index
    %c0_37 = arith.constant 0 : index
    %c0_38 = arith.constant 0 : index
    %64 = vector.load %arg5[%c0_36, %c0_37, %c0_38] : memref<2x18x128xf32, #tpu.memory_space<vmem>>, vector<2x18x128xf32>
    %65 = arith.truncf %64 : vector<2x18x128xf32> to vector<2x18x128xbf16>
    %66 = vector.extract_strided_slice %65 {offsets = [0, 0, 0], sizes = [2, 16, 128], strides = [1, 1, 1]} : vector<2x18x128xbf16> to vector<2x16x128xbf16>
    %67 = vector.shape_cast %66 : vector<2x16x128xbf16> to vector<32x128xbf16>
    %c0_39 = arith.constant 0 : index
    %c0_40 = arith.constant 0 : index
    %c0_41 = arith.constant 0 : index
    %68 = vector.load %arg3[%c0_39, %c0_40, %c0_41] : memref<3x128x128xbf16, #tpu.memory_space<vmem>>, vector<1x128x128xbf16>
    %69 = vector.shape_cast %68 : vector<1x128x128xbf16> to vector<128x128xbf16>
    %cst_42 = arith.constant dense<0.000000e+00> : vector<32x128xf32>
    %70 = tpu.matmul %67, %69, %cst_42 {dimension_numbers = #tpu.dot_dimension_numbers<[1], [0], [0], [1], [0, 0, 1, 1], [], []>} : vector<32x128xbf16>, vector<128x128xbf16>, vector<32x128xf32> -> vector<32x128xf32>
    %71 = vector.extract_strided_slice %65 {offsets = [0, 1, 0], sizes = [2, 16, 128], strides = [1, 1, 1]} : vector<2x18x128xbf16> to vector<2x16x128xbf16>
    %72 = vector.shape_cast %71 : vector<2x16x128xbf16> to vector<32x128xbf16>
    %c1_43 = arith.constant 1 : index
    %c0_44 = arith.constant 0 : index
    %c0_45 = arith.constant 0 : index
    %73 = vector.load %arg3[%c1_43, %c0_44, %c0_45] : memref<3x128x128xbf16, #tpu.memory_space<vmem>>, vector<1x128x128xbf16>
    %74 = vector.shape_cast %73 : vector<1x128x128xbf16> to vector<128x128xbf16>
    %cst_46 = arith.constant dense<0.000000e+00> : vector<32x128xf32>
    %75 = tpu.matmul %72, %74, %cst_46 {dimension_numbers = #tpu.dot_dimension_numbers<[1], [0], [0], [1], [0, 0, 1, 1], [], []>} : vector<32x128xbf16>, vector<128x128xbf16>, vector<32x128xf32> -> vector<32x128xf32>
    %76 = arith.addf %70, %75 : vector<32x128xf32>
    %77 = vector.extract_strided_slice %65 {offsets = [0, 2, 0], sizes = [2, 16, 128], strides = [1, 1, 1]} : vector<2x18x128xbf16> to vector<2x16x128xbf16>
    %78 = vector.shape_cast %77 : vector<2x16x128xbf16> to vector<32x128xbf16>
    %c2_47 = arith.constant 2 : index
    %c0_48 = arith.constant 0 : index
    %c0_49 = arith.constant 0 : index
    %79 = vector.load %arg3[%c2_47, %c0_48, %c0_49] : memref<3x128x128xbf16, #tpu.memory_space<vmem>>, vector<1x128x128xbf16>
    %80 = vector.shape_cast %79 : vector<1x128x128xbf16> to vector<128x128xbf16>
    %cst_50 = arith.constant dense<0.000000e+00> : vector<32x128xf32>
    %81 = tpu.matmul %78, %80, %cst_50 {dimension_numbers = #tpu.dot_dimension_numbers<[1], [0], [0], [1], [0, 0, 1, 1], [], []>} : vector<32x128xbf16>, vector<128x128xbf16>, vector<32x128xf32> -> vector<32x128xf32>
    %82 = arith.addf %76, %81 : vector<32x128xf32>
    %83 = vector.shape_cast %82 : vector<32x128xf32> to vector<2x16x128xf32>
    %84 = vector.shape_cast %83 : vector<2x16x128xf32> to vector<32x128xf32>
    %c8_i32_51 = arith.constant 8 : i32
    %85 = tpu.dynamic_rotate %84 by %c8_i32_51 dim 1 : vector<32x128xf32>, i32 -> vector<32x128xf32>
    %86 = arith.addf %84, %85 : vector<32x128xf32>
    %c16_i32_52 = arith.constant 16 : i32
    %87 = tpu.dynamic_rotate %86 by %c16_i32_52 dim 1 : vector<32x128xf32>, i32 -> vector<32x128xf32>
    %88 = arith.addf %86, %87 : vector<32x128xf32>
    %c32_i32_53 = arith.constant 32 : i32
    %89 = tpu.dynamic_rotate %88 by %c32_i32_53 dim 1 : vector<32x128xf32>, i32 -> vector<32x128xf32>
    %90 = arith.addf %88, %89 : vector<32x128xf32>
    %c64_i32_54 = arith.constant 64 : i32
    %91 = tpu.dynamic_rotate %90 by %c64_i32_54 dim 1 : vector<32x128xf32>, i32 -> vector<32x128xf32>
    %92 = arith.addf %90, %91 : vector<32x128xf32>
    %93 = vector.shape_cast %92 : vector<32x128xf32> to vector<2x16x128xf32>
    %cst_55 = arith.constant dense<0.000000e+00> : vector<2x128xf32>
    %94 = vector.multi_reduction <add>, %93, %cst_55 [1] : vector<2x16x128xf32> to vector<2x128xf32>
    %95 = vector.shape_cast %94 : vector<2x128xf32> to vector<2x1x128xf32>
    %cst_56 = arith.constant 3.906250e-03 : f32
    %96 = vector.broadcast %cst_56 : f32 to vector<2x1x128xf32>
    %97 = arith.mulf %95, %96 : vector<2x1x128xf32>
    %98 = vector.broadcast %97 : vector<2x1x128xf32> to vector<2x16x128xf32>
    %99 = arith.subf %83, %98 : vector<2x16x128xf32>
    %100 = arith.mulf %99, %99 : vector<2x16x128xf32>
    %101 = vector.shape_cast %100 : vector<2x16x128xf32> to vector<32x128xf32>
    %c8_i32_57 = arith.constant 8 : i32
    %102 = tpu.dynamic_rotate %101 by %c8_i32_57 dim 1 : vector<32x128xf32>, i32 -> vector<32x128xf32>
    %103 = arith.addf %101, %102 : vector<32x128xf32>
    %c16_i32_58 = arith.constant 16 : i32
    %104 = tpu.dynamic_rotate %103 by %c16_i32_58 dim 1 : vector<32x128xf32>, i32 -> vector<32x128xf32>
    %105 = arith.addf %103, %104 : vector<32x128xf32>
    %c32_i32_59 = arith.constant 32 : i32
    %106 = tpu.dynamic_rotate %105 by %c32_i32_59 dim 1 : vector<32x128xf32>, i32 -> vector<32x128xf32>
    %107 = arith.addf %105, %106 : vector<32x128xf32>
    %c64_i32_60 = arith.constant 64 : i32
    %108 = tpu.dynamic_rotate %107 by %c64_i32_60 dim 1 : vector<32x128xf32>, i32 -> vector<32x128xf32>
    %109 = arith.addf %107, %108 : vector<32x128xf32>
    %110 = vector.shape_cast %109 : vector<32x128xf32> to vector<2x16x128xf32>
    %cst_61 = arith.constant dense<0.000000e+00> : vector<2x128xf32>
    %111 = vector.multi_reduction <add>, %110, %cst_61 [1] : vector<2x16x128xf32> to vector<2x128xf32>
    %112 = vector.shape_cast %111 : vector<2x128xf32> to vector<2x1x128xf32>
    %cst_62 = arith.constant 3.906250e-03 : f32
    %113 = vector.broadcast %cst_62 : f32 to vector<2x1x128xf32>
    %114 = arith.mulf %112, %113 : vector<2x1x128xf32>
    %cst_63 = arith.constant 9.99999974E-6 : f32
    %115 = vector.broadcast %cst_63 : f32 to vector<2x1x128xf32>
    %116 = arith.addf %114, %115 : vector<2x1x128xf32>
    %117 = math.rsqrt %116 : vector<2x1x128xf32>
    %118 = vector.broadcast %117 : vector<2x1x128xf32> to vector<2x16x128xf32>
    %119 = arith.mulf %99, %118 : vector<2x16x128xf32>
    %120 = arith.addf %119, %3 : vector<2x16x128xf32>
    %c0_64 = arith.constant 0 : index
    %c0_65 = arith.constant 0 : index
    %c0_66 = arith.constant 0 : index
    %121 = vector.load %arg4[%c0_64, %c0_65, %c0_66] : memref<2x16x128xf32, #tpu.memory_space<vmem>>, vector<2x16x128xf32>
    tpu.vector_store %arg4[%c0_64, %c0_65, %c0_66], %120 {strides = array<i32>} : memref<2x16x128xf32, #tpu.memory_space<vmem>>, vector<2x16x128xf32>,
    return
  }
  func.func @transform_0(%arg0: i32) -> (i32, i32, i32) {
    %c0_i32 = arith.constant 0 : i32
    %c0_i32_0 = arith.constant 0 : i32
    %c0_i32_1 = arith.constant 0 : i32
    return %arg0, %c0_i32, %c0_i32_0 : i32, i32, i32
  }
  func.func @transform_1(%arg0: i32) -> (i32, i32, i32) {
    %c0_i32 = arith.constant 0 : i32
    %c0_i32_0 = arith.constant 0 : i32
    %c0_i32_1 = arith.constant 0 : i32
    %c0_i32_2 = arith.constant 0 : i32
    return %c0_i32, %c0_i32_0, %c0_i32_1 : i32, i32, i32
  }
  func.func @transform_2(%arg0: i32) -> (i32, i32, i32) {
    %c0_i32 = arith.constant 0 : i32
    %c0_i32_0 = arith.constant 0 : i32
    %c0_i32_1 = arith.constant 0 : i32
    %c0_i32_2 = arith.constant 0 : i32
    return %c0_i32, %c0_i32_0, %c0_i32_1 : i32, i32, i32
  }
  func.func @transform_3(%arg0: i32) -> (i32, i32, i32) {
    %c0_i32 = arith.constant 0 : i32
    %c0_i32_0 = arith.constant 0 : i32
    %c0_i32_1 = arith.constant 0 : i32
    return %arg0, %c0_i32, %c0_i32_0 : i32, i32, i32
  }
}

</mosaic_0001>

<llo_original>
// kernel: tpu_custom_call.1
$region0: #{tpu_custom_call.1}
  #allocation0 [shape = 'u32[]', space=smem, size = 0x4, offset = 0x4, fixed_abs, tag = 'smem constant byte address 0x4 - core index']
  #allocation1 [shape = 'u32[144,128]{1,0:T(1,128)}', space=vmem, size = 0x12000, scoped, tag = 'internal scratch']
  #allocation2 [shape = 'f32[2,18,128]{2,1,0:T(8,128)}', space=vmem, size = 0x6000, scoped, tag = 'scratch operand']
  %s0 = inlined_call_operand.hbm [shape: f32[2,16,128], index: 0, kind: input, shape index: {}]
  %s1 = inlined_call_operand.hbm [shape: bf16[3,128,128], index: 1, kind: input, shape index: {}]
  %s2 = inlined_call_operand.hbm [shape: bf16[3,128,128], index: 2, kind: input, shape index: {}]
  %s3 = inlined_call_operand.hbm [shape: f32[2,16,128], index: 3, kind: output, shape index: {}]
  %s4 = sld [smem:[#allocation0]]
  $region34: #{tpu_custom_call.1} parent=0
    _
  %s6 = ssub.s32 1, %s4
  %s7 = scalar_select 0, %s6, %s4
  $region1: #{tpu_custom_call.1} parent=0
    #allocation3 [shape = 'u8[16384]{0}', space=vmem, size = 0x4000, scoped, tag = 'input window, operand 0, single buffered']
    #allocation4 [shape = 's32[1]{0}', space=sflag, size = 0x4, scoped, tag = 'scoped memory for tpu_custom_call.1']
    #allocation5 [shape = 's32[1]{0}', space=sflag, size = 0x4, scoped, tag = 'scoped memory for tpu_custom_call.1']
    #allocation6 [shape = 'u8[98304]{0}', space=vmem, size = 0x18000, scoped, tag = 'input window, operand 1, single buffered']
    #allocation7 [shape = 's32[1]{0}', space=sflag, size = 0x4, scoped, tag = 'scoped memory for tpu_custom_call.1']
    #allocation8 [shape = 'u8[98304]{0}', space=vmem, size = 0x18000, scoped, tag = 'input window, operand 2, single buffered']
    #allocation9 [shape = 'u8[16384]{0}', space=vmem, size = 0x4000, scoped, tag = 'output window, operand 0, single buffered']
    %8 = vsyncpa [#allocation4], 0
    %9 = vsyncpa [#allocation7], 0
    %10 = vsyncpa [#allocation5], 0
    // Predicated region
    $region2: #{tpu_custom_call.1} parent=1 // pred_check
      _
    $region3: #{tpu_custom_call.1} parent=1 // pred_check_branch
      %12 = sbr.rel (0) target = $region5
    $region4: #{tpu_custom_call.1} parent=1 // pred_region
      %s14 = ssub.s32 512, 512
      %15 = vsyncadd [#allocation4], %s14
      %s16 = sshll.u32 [#allocation3], 4
      %s17 = int_to_ptr.vmem [resolvable:$true] %s16
      %22 = dma.hbm_to_vmem [thread:$0]  %s0, 512, %s17, [#allocation4], 128, 128, 8
    $region5: #{tpu_custom_call.1} parent=1 // pred_fallthru
      _
    // Predicated region
    $region6: #{tpu_custom_call.1} parent=1 // pred_check
      _
    $region7: #{tpu_custom_call.1} parent=1 // pred_check_branch
      %24 = sbr.rel (0) target = $region9
    $region8: #{tpu_custom_call.1} parent=1 // pred_region
      %s26 = ssub.s32 3072, 3072
      %27 = vsyncadd [#allocation7], %s26
      %s28 = sshll.u32 [#allocation6], 4
      %s29 = int_to_ptr.vmem [resolvable:$true] %s28
      %34 = dma.hbm_to_vmem [thread:$0]  %s1, 3072, %s29, [#allocation7], 64, 64, 4
    $region9: #{tpu_custom_call.1} parent=1 // pred_fallthru
      _
    // Predicated region
    $region10: #{tpu_custom_call.1} parent=1 // pred_check
      _
    $region11: #{tpu_custom_call.1} parent=1 // pred_check_branch
      %36 = sbr.rel (0) target = $region13
    $region12: #{tpu_custom_call.1} parent=1 // pred_region
      %s38 = ssub.s32 3072, 3072
      %39 = vsyncadd [#allocation7], %s38
      %s40 = sshll.u32 [#allocation8], 4
      %s41 = int_to_ptr.vmem [resolvable:$true] %s40
      %46 = dma.hbm_to_vmem [thread:$0]  %s2, 3072, %s41, [#allocation7], 64, 64, 4
    $region13: #{tpu_custom_call.1} parent=1 // pred_fallthru
      _
    // Predicated region
    $region14: #{tpu_custom_call.1} parent=1 // pred_check
      _
    $region15: #{tpu_custom_call.1} parent=1 // pred_check_branch
      %48 = sbr.rel (0) target = $region17
    $region16: #{tpu_custom_call.1} parent=1 // pred_region
      %49 = dma.done [#allocation4], 512
    $region17: #{tpu_custom_call.1} parent=1 // pred_fallthru
      _
    // Predicated region
    $region18: #{tpu_custom_call.1} parent=1 // pred_check
      _
    $region19: #{tpu_custom_call.1} parent=1 // pred_check_branch
      %51 = sbr.rel (0) target = $region21
    $region20: #{tpu_custom_call.1} parent=1 // pred_region
      %52 = dma.done [#allocation7], 3072
    $region21: #{tpu_custom_call.1} parent=1 // pred_fallthru
      _
    // Predicated region
    $region22: #{tpu_custom_call.1} parent=1 // pred_check
      _
    $region23: #{tpu_custom_call.1} parent=1 // pred_check_branch
      %54 = sbr.rel (0) target = $region25
    $region24: #{tpu_custom_call.1} parent=1 // pred_region
      %55 = dma.done [#allocation7], 3072
    $region25: #{tpu_custom_call.1} parent=1 // pred_fallthru
      _
    %57 = vst [vmem:[#allocation2] sm:$0x1] 0.0
    %58 = vst [vmem:[#allocation2 + $0x18] sm:$0x1] 0.0
    %59 = vst [vmem:[#allocation2 + $0x11] sm:$0x1] 0.0
    %60 = vst [vmem:[#allocation2 + $0x29] sm:$0x1] 0.0
    %v61 = vld [vmem:[#allocation3] sm:$0xff]
    %v62 = vld [vmem:[#allocation3 + $0x8] sm:$0xff]
    %v63 = vld [vmem:[#allocation3 + $0x10] sm:$0xff]
    %v64 = vld [vmem:[#allocation3 + $0x18] sm:$0xff]
    %65 = vst [vmem:[#allocation2 + $0x1] sm:$0xff] %v61
    %66 = vst [vmem:[#allocation2 + $0x9] sm:$0xff] %v62
    %67 = vst [vmem:[#allocation2 + $0x19] sm:$0xff] %v63
    %68 = vst [vmem:[#allocation2 + $0x21] sm:$0xff] %v64
    %v69 = vld [vmem:[#allocation2] sm:$0xff]
    %v70 = vld [vmem:[#allocation2 + $0x8] sm:$0xff]
    %v71 = vld [vmem:[#allocation2 + $0x10] sm:$0x3]
    %v72 = vld [vmem:[#allocation2 + $0x18] sm:$0xff]
    %v73 = vld [vmem:[#allocation2 + $0x20] sm:$0xff]
    %v74 = vld [vmem:[#allocation2 + $0x28] sm:$0x3]
    %v75 = vpack.c.bf16 %v70, %v69
    %v76 = vpack.c.bf16 %v71, %v71
    %v77 = vpack.c.bf16 %v73, %v72
    %v78 = vpack.c.bf16 %v74, %v74
    %v79 = vld [vmem:[#allocation6] sm:$0xf]
    %v80 = vld [vmem:[#allocation6 + $0x4] sm:$0xf]
    %v81 = vld [vmem:[#allocation6 + $0x8] sm:$0xf]
    %v82 = vld [vmem:[#allocation6 + $0xc] sm:$0xf]
    %v83 = vld [vmem:[#allocation6 + $0x10] sm:$0xf]
    %v84 = vld [vmem:[#allocation6 + $0x14] sm:$0xf]
    %v85 = vld [vmem:[#allocation6 + $0x18] sm:$0xf]
    %v86 = vld [vmem:[#allocation6 + $0x1c] sm:$0xf]
    %v87 = vld [vmem:[#allocation6 + $0x20] sm:$0xf]
    %v88 = vld [vmem:[#allocation6 + $0x24] sm:$0xf]
    %v89 = vld [vmem:[#allocation6 + $0x28] sm:$0xf]
    %v90 = vld [vmem:[#allocation6 + $0x2c] sm:$0xf]
    %v91 = vld [vmem:[#allocation6 + $0x30] sm:$0xf]
    %v92 = vld [vmem:[#allocation6 + $0x34] sm:$0xf]
    %v93 = vld [vmem:[#allocation6 + $0x38] sm:$0xf]
    %v94 = vld [vmem:[#allocation6 + $0x3c] sm:$0xf]
    %vm95 = vsmask.f32 7424
    %v97 = vshrl.u32 %v75, 16
    %v99 = vshll.u32 %v75, 16
    %v101 = vrot.slane %v99, 1
    %v102 = vor.u32 %v97, %v101
    %v104 = vshll.u32 %v76, 16
    %v106 = vrot.slane %v104, 1
    %v107 = vsel %vm95, %v102, %v106
    %v109 = vshrl.u32 %v77, 16
    %v111 = vshll.u32 %v77, 16
    %v113 = vrot.slane %v111, 1
    %v114 = vor.u32 %v109, %v113
    %v116 = vshll.u32 %v78, 16
    %v118 = vrot.slane %v116, 1
    %v119 = vsel %vm95, %v114, %v118
    %s122 = scalar_lea.vmem [#allocation6], 64
    %v123 = vld [vmem:[%s122] sm:$0xf]
    %v124 = vld [vmem:[%s122 + $0x4] sm:$0xf]
    %v125 = vld [vmem:[%s122 + $0x8] sm:$0xf]
    %v126 = vld [vmem:[%s122 + $0xc] sm:$0xf]
    %v127 = vld [vmem:[%s122 + $0x10] sm:$0xf]
    %v128 = vld [vmem:[%s122 + $0x14] sm:$0xf]
    %v129 = vld [vmem:[%s122 + $0x18] sm:$0xf]
    %v130 = vld [vmem:[%s122 + $0x1c] sm:$0xf]
    %v131 = vld [vmem:[%s122 + $0x20] sm:$0xf]
    %v132 = vld [vmem:[%s122 + $0x24] sm:$0xf]
    %v133 = vld [vmem:[%s122 + $0x28] sm:$0xf]
    %v134 = vld [vmem:[%s122 + $0x2c] sm:$0xf]
    %v135 = vld [vmem:[%s122 + $0x30] sm:$0xf]
    %v136 = vld [vmem:[%s122 + $0x34] sm:$0xf]
    %v137 = vld [vmem:[%s122 + $0x38] sm:$0xf]
    %v138 = vld [vmem:[%s122 + $0x3c] sm:$0xf]
    %v155 = vunpack.c.l.b16 %v123
    %v156 = vunpack.c.l.b16 %v124
    %v157 = vunpack.c.l.b16 %v125
    %v158 = vunpack.c.l.b16 %v126
    %v159 = vunpack.c.l.b16 %v127
    %v160 = vunpack.c.l.b16 %v128
    %v161 = vunpack.c.l.b16 %v129
    %v162 = vunpack.c.l.b16 %v130
    %v163 = vunpack.c.l.b16 %v131
    %v164 = vunpack.c.l.b16 %v132
    %v165 = vunpack.c.l.b16 %v133
    %v166 = vunpack.c.l.b16 %v134
    %v167 = vunpack.c.l.b16 %v135
    %v168 = vunpack.c.l.b16 %v136
    %v169 = vunpack.c.l.b16 %v137
    %v170 = vunpack.c.l.b16 %v138
    %v171 = vpack.c.b16 %v156, %v155
    %v172 = vpack.c.b16 %v158, %v157
    %v173 = vpack.c.b16 %v160, %v159
    %v174 = vpack.c.b16 %v162, %v161
    %v175 = vpack.c.b16 %v164, %v163
    %v176 = vpack.c.b16 %v166, %v165
    %v177 = vpack.c.b16 %v168, %v167
    %v178 = vpack.c.b16 %v170, %v169
    %187 = vmatprep.subr.bf16.mxu0 0
    %188 = vmatpush1.bf16.msra.mxu0 %v171
    %189 = vmatprep.subr.bf16.mxu0 0
    %190 = vmatpush1.bf16.msra.mxu0 %v172
    %191 = vmatprep.subr.bf16.mxu0 0
    %192 = vmatpush1.bf16.msra.mxu0 %v173
    %193 = vmatprep.subr.bf16.mxu0 0
    %194 = vmatpush1.bf16.msra.mxu0 %v174
    %195 = vmatprep.subr.bf16.mxu0 0
    %196 = vmatpush1.bf16.msra.mxu0 %v175
    %197 = vmatprep.subr.bf16.mxu0 0
    %198 = vmatpush1.bf16.msra.mxu0 %v176
    %199 = vmatprep.subr.bf16.mxu0 0
    %200 = vmatpush1.bf16.msra.mxu0 %v177
    %201 = vmatprep.subr.bf16.mxu0 0
    %202 = vmatpush1.bf16.msra.mxu0 %v178
    %203 = vmatprep.subr.bf16.mxu0 0
    %204 = vmatpush1.bf16.msra.mxu0 0
    %205 = vmatprep.subr.bf16.mxu0 0
    %206 = vmatpush1.bf16.msra.mxu0 0
    %207 = vmatprep.subr.bf16.mxu0 0
    %208 = vmatpush1.bf16.msra.mxu0 0
    %209 = vmatprep.subr.bf16.mxu0 0
    %210 = vmatpush1.bf16.msra.mxu0 0
    %211 = vmatprep.subr.bf16.mxu0 0
    %212 = vmatpush1.bf16.msra.mxu0 0
    %213 = vmatprep.subr.bf16.mxu0 0
    %214 = vmatpush1.bf16.msra.mxu0 0
    %215 = vmatprep.subr.bf16.mxu0 0
    %216 = vmatpush1.bf16.msra.mxu0 0
    %217 = vmatprep.subr.bf16.mxu0 0
    %218 = vmatpush1.bf16.msra.mxu0 0
    %219 = vmatprep.mubr.bf16.mxu0 0
    %220 = vmatmul.mubr.bf16.gmra.mrb[0].mxu0 %v107
    %v221 = vpop.f32.mrb[0].mxu0
    %v222 = vadd.f32 0.0, %v221
    %v223 = vpop.f32.mrb[0].mxu0
    %v224 = vpop.f32.mrb[0].mxu0
    %v225 = vadd.f32 0.0, %v224
    %v226 = vpop.f32.mrb[0].mxu0
    %227 = vmatprep.mubr.bf16.mxu0 0
    %228 = vmatmul.mubr.bf16.gmra.mrb[0].mxu0 %v119
    %v229 = vpop.f32.mrb[0].mxu0
    %v230 = vadd.f32 0.0, %v229
    %v231 = vpop.f32.mrb[0].mxu0
    %v232 = vpop.f32.mrb[0].mxu0
    %v233 = vadd.f32 0.0, %v232
    %v234 = vpop.f32.mrb[0].mxu0
    %235 = vdwg.mxu0
    %v252 = vunpack.c.l.b16 %v79
    %v253 = vunpack.c.l.b16 %v80
    %v254 = vunpack.c.l.b16 %v81
    %v255 = vunpack.c.l.b16 %v82
    %v256 = vunpack.c.l.b16 %v83
    %v257 = vunpack.c.l.b16 %v84
    %v258 = vunpack.c.l.b16 %v85
    %v259 = vunpack.c.l.b16 %v86
    %v260 = vunpack.c.l.b16 %v87
    %v261 = vunpack.c.l.b16 %v88
    %v262 = vunpack.c.l.b16 %v89
    %v263 = vunpack.c.l.b16 %v90
    %v264 = vunpack.c.l.b16 %v91
    %v265 = vunpack.c.l.b16 %v92
    %v266 = vunpack.c.l.b16 %v93
    %v267 = vunpack.c.l.b16 %v94
    %v268 = vpack.c.b16 %v253, %v252
    %v269 = vpack.c.b16 %v255, %v254
    %v270 = vpack.c.b16 %v257, %v256
    %v271 = vpack.c.b16 %v259, %v258
    %v272 = vpack.c.b16 %v261, %v260
    %v273 = vpack.c.b16 %v263, %v262
    %v274 = vpack.c.b16 %v265, %v264
    %v275 = vpack.c.b16 %v267, %v266
    %284 = vmatprep.subr.bf16.mxu0 0
    %285 = vmatpush1.bf16.msra.mxu0 %v268
    %286 = vmatprep.subr.bf16.mxu0 0
    %287 = vmatpush1.bf16.msra.mxu0 %v269
    %288 = vmatprep.subr.bf16.mxu0 0
    %289 = vmatpush1.bf16.msra.mxu0 %v270
    %290 = vmatprep.subr.bf16.mxu0 0
    %291 = vmatpush1.bf16.msra.mxu0 %v271
    %292 = vmatprep.subr.bf16.mxu0 0
    %293 = vmatpush1.bf16.msra.mxu0 %v272
    %294 = vmatprep.subr.bf16.mxu0 0
    %295 = vmatpush1.bf16.msra.mxu0 %v273
    %296 = vmatprep.subr.bf16.mxu0 0
    %297 = vmatpush1.bf16.msra.mxu0 %v274
    %298 = vmatprep.subr.bf16.mxu0 0
    %299 = vmatpush1.bf16.msra.mxu0 %v275
    %300 = vmatprep.subr.bf16.mxu0 0
    %301 = vmatpush1.bf16.msra.mxu0 0
    %302 = vmatprep.subr.bf16.mxu0 0
    %303 = vmatpush1.bf16.msra.mxu0 0
    %304 = vmatprep.subr.bf16.mxu0 0
    %305 = vmatpush1.bf16.msra.mxu0 0
    %306 = vmatprep.subr.bf16.mxu0 0
    %307 = vmatpush1.bf16.msra.mxu0 0
    %308 = vmatprep.subr.bf16.mxu0 0
    %309 = vmatpush1.bf16.msra.mxu0 0
    %310 = vmatprep.subr.bf16.mxu0 0
    %311 = vmatpush1.bf16.msra.mxu0 0
    %312 = vmatprep.subr.bf16.mxu0 0
    %313 = vmatpush1.bf16.msra.mxu0 0
    %314 = vmatprep.subr.bf16.mxu0 0
    %315 = vmatpush1.bf16.msra.mxu0 0
    %316 = vmatprep.mubr.bf16.mxu0 0
    %317 = vmatmul.mubr.bf16.gmra.mrb[0].mxu0 %v75
    %v318 = vpop.f32.mrb[0].mxu0
    %v319 = vadd.f32 %v222, %v318
    %v320 = vpop.f32.mrb[0].mxu0
    %v321 = vpop.f32.mrb[0].mxu0
    %v322 = vadd.f32 %v225, %v321
    %v323 = vpop.f32.mrb[0].mxu0
    %324 = vmatprep.mubr.bf16.mxu0 0
    %325 = vmatmul.mubr.bf16.gmra.mrb[0].mxu0 %v77
    %v326 = vpop.f32.mrb[0].mxu0
    %v327 = vadd.f32 %v230, %v326
    %v328 = vpop.f32.mrb[0].mxu0
    %v329 = vpop.f32.mrb[0].mxu0
    %v330 = vadd.f32 %v233, %v329
    %v331 = vpop.f32.mrb[0].mxu0
    %332 = vdwg.mxu0
    %vm337 = vcmask 1046528
    %v338 = vrot.slane %v75, 1
    %v339 = vrot.slane %v76, 1
    %v340 = vsel %vm337, %v338, %v339
    %v341 = vrot.slane %v77, 1
    %v342 = vrot.slane %v78, 1
    %v343 = vsel %vm337, %v341, %v342
    %s346 = scalar_lea.vmem [#allocation6], 128
    %v347 = vld [vmem:[%s346] sm:$0xf]
    %v348 = vld [vmem:[%s346 + $0x4] sm:$0xf]
    %v349 = vld [vmem:[%s346 + $0x8] sm:$0xf]
    %v350 = vld [vmem:[%s346 + $0xc] sm:$0xf]
    %v351 = vld [vmem:[%s346 + $0x10] sm:$0xf]
    %v352 = vld [vmem:[%s346 + $0x14] sm:$0xf]
    %v353 = vld [vmem:[%s346 + $0x18] sm:$0xf]
    %v354 = vld [vmem:[%s346 + $0x1c] sm:$0xf]
    %v355 = vld [vmem:[%s346 + $0x20] sm:$0xf]
    %v356 = vld [vmem:[%s346 + $0x24] sm:$0xf]
    %v357 = vld [vmem:[%s346 + $0x28] sm:$0xf]
    %v358 = vld [vmem:[%s346 + $0x2c] sm:$0xf]
    %v359 = vld [vmem:[%s346 + $0x30] sm:$0xf]
    %v360 = vld [vmem:[%s346 + $0x34] sm:$0xf]
    %v361 = vld [vmem:[%s346 + $0x38] sm:$0xf]
    %v362 = vld [vmem:[%s346 + $0x3c] sm:$0xf]
    %v379 = vunpack.c.l.b16 %v347
    %v380 = vunpack.c.l.b16 %v348
    %v381 = vunpack.c.l.b16 %v349
    %v382 = vunpack.c.l.b16 %v350
    %v383 = vunpack.c.l.b16 %v351
    %v384 = vunpack.c.l.b16 %v352
    %v385 = vunpack.c.l.b16 %v353
    %v386 = vunpack.c.l.b16 %v354
    %v387 = vunpack.c.l.b16 %v355
    %v388 = vunpack.c.l.b16 %v356
    %v389 = vunpack.c.l.b16 %v357
    %v390 = vunpack.c.l.b16 %v358
    %v391 = vunpack.c.l.b16 %v359
    %v392 = vunpack.c.l.b16 %v360
    %v393 = vunpack.c.l.b16 %v361
    %v394 = vunpack.c.l.b16 %v362
    %v395 = vpack.c.b16 %v380, %v379
    %v396 = vpack.c.b16 %v382, %v381
    %v397 = vpack.c.b16 %v384, %v383
    %v398 = vpack.c.b16 %v386, %v385
    %v399 = vpack.c.b16 %v388, %v387
    %v400 = vpack.c.b16 %v390, %v389
    %v401 = vpack.c.b16 %v392, %v391
    %v402 = vpack.c.b16 %v394, %v393
    %411 = vmatprep.subr.bf16.mxu0 0
    %412 = vmatpush1.bf16.msra.mxu0 %v395
    %413 = vmatprep.subr.bf16.mxu0 0
    %414 = vmatpush1.bf16.msra.mxu0 %v396
    %415 = vmatprep.subr.bf16.mxu0 0
    %416 = vmatpush1.bf16.msra.mxu0 %v397
    %417 = vmatprep.subr.bf16.mxu0 0
    %418 = vmatpush1.bf16.msra.mxu0 %v398
    %419 = vmatprep.subr.bf16.mxu0 0
    %420 = vmatpush1.bf16.msra.mxu0 %v399
    %421 = vmatprep.subr.bf16.mxu0 0
    %422 = vmatpush1.bf16.msra.mxu0 %v400
    %423 = vmatprep.subr.bf16.mxu0 0
    %424 = vmatpush1.bf16.msra.mxu0 %v401
    %425 = vmatprep.subr.bf16.mxu0 0
    %426 = vmatpush1.bf16.msra.mxu0 %v402
    %427 = vmatprep.subr.bf16.mxu0 0
    %428 = vmatpush1.bf16.msra.mxu0 0
    %429 = vmatprep.subr.bf16.mxu0 0
    %430 = vmatpush1.bf16.msra.mxu0 0
    %431 = vmatprep.subr.bf16.mxu0 0
    %432 = vmatpush1.bf16.msra.mxu0 0
    %433 = vmatprep.subr.bf16.mxu0 0
    %434 = vmatpush1.bf16.msra.mxu0 0
    %435 = vmatprep.subr.bf16.mxu0 0
    %436 = vmatpush1.bf16.msra.mxu0 0
    %437 = vmatprep.subr.bf16.mxu0 0
    %438 = vmatpush1.bf16.msra.mxu0 0
    %439 = vmatprep.subr.bf16.mxu0 0
    %440 = vmatpush1.bf16.msra.mxu0 0
    %441 = vmatprep.subr.bf16.mxu0 0
    %442 = vmatpush1.bf16.msra.mxu0 0
    %443 = vmatprep.mubr.bf16.mxu0 0
    %444 = vmatmul.mubr.bf16.gmra.mrb[0].mxu0 %v340
    %v445 = vpop.f32.mrb[0].mxu0
    %v446 = vadd.f32 0.0, %v445
    %v447 = vpop.f32.mrb[0].mxu0
    %v448 = vpop.f32.mrb[0].mxu0
    %v449 = vadd.f32 0.0, %v448
    %v450 = vpop.f32.mrb[0].mxu0
    %451 = vmatprep.mubr.bf16.mxu0 0
    %452 = vmatmul.mubr.bf16.gmra.mrb[0].mxu0 %v343
    %v453 = vpop.f32.mrb[0].mxu0
    %v454 = vadd.f32 0.0, %v453
    %v455 = vpop.f32.mrb[0].mxu0
    %v456 = vpop.f32.mrb[0].mxu0
    %v457 = vadd.f32 0.0, %v456
    %v458 = vpop.f32.mrb[0].mxu0
    %459 = vdwg.mxu0
    %v460 = vadd.f32 %v319, %v446
    %v461 = vadd.f32 %v322, %v449
    %v462 = vadd.f32 %v327, %v454
    %v463 = vadd.f32 %v330, %v457
    %464 = vrot.lane.b32.xlu0 %v460, 8
    %v465 = vpop.permute.xlu0 %464
    %466 = vrot.lane.b32.xlu0 %v461, 8
    %v467 = vpop.permute.xlu0 %466
    %468 = vrot.lane.b32.xlu0 %v462, 8
    %v469 = vpop.permute.xlu0 %468
    %470 = vrot.lane.b32.xlu0 %v463, 8
    %v471 = vpop.permute.xlu0 %470
    %v472 = vadd.f32 %v460, %v465
    %v473 = vadd.f32 %v461, %v467
    %v474 = vadd.f32 %v462, %v469
    %v475 = vadd.f32 %v463, %v471
    %476 = vrot.lane.b32.xlu0 %v472, 16
    %v477 = vpop.permute.xlu0 %476
    %478 = vrot.lane.b32.xlu0 %v473, 16
    %v479 = vpop.permute.xlu0 %478
    %480 = vrot.lane.b32.xlu0 %v474, 16
    %v481 = vpop.permute.xlu0 %480
    %482 = vrot.lane.b32.xlu0 %v475, 16
    %v483 = vpop.permute.xlu0 %482
    %v484 = vadd.f32 %v472, %v477
    %v485 = vadd.f32 %v473, %v479
    %v486 = vadd.f32 %v474, %v481
    %v487 = vadd.f32 %v475, %v483
    %488 = vrot.lane.b32.xlu0 %v484, 32
    %v489 = vpop.permute.xlu0 %488
    %490 = vrot.lane.b32.xlu0 %v485, 32
    %v491 = vpop.permute.xlu0 %490
    %492 = vrot.lane.b32.xlu0 %v486, 32
    %v493 = vpop.permute.xlu0 %492
    %494 = vrot.lane.b32.xlu0 %v487, 32
    %v495 = vpop.permute.xlu0 %494
    %v496 = vadd.f32 %v484, %v489
    %v497 = vadd.f32 %v485, %v491
    %v498 = vadd.f32 %v486, %v493
    %v499 = vadd.f32 %v487, %v495
    %500 = vrot.lane.b32.xlu0 %v496, 64
    %v501 = vpop.permute.xlu0 %500
    %502 = vrot.lane.b32.xlu0 %v497, 64
    %v503 = vpop.permute.xlu0 %502
    %504 = vrot.lane.b32.xlu0 %v498, 64
    %v505 = vpop.permute.xlu0 %504
    %506 = vrot.lane.b32.xlu0 %v499, 64
    %v507 = vpop.permute.xlu0 %506
    %v508 = vadd.f32 %v496, %v501
    %v509 = vadd.f32 %v497, %v503
    %v510 = vadd.f32 %v498, %v505
    %v511 = vadd.f32 %v499, %v507
    %v512 = vadd.f32 %v508, %v509
    %v513 = vrot.slane %v512, 4
    %v514 = vadd.f32 %v512, %v513
    %v515 = vrot.slane %v514, 2
    %v516 = vadd.f32 %v514, %v515
    %v517 = vrot.slane %v516, 1
    %v518 = vadd.f32 %v516, %v517
    %v519 = vadd.f32 %v510, %v511
    %v520 = vrot.slane %v519, 4
    %v521 = vadd.f32 %v519, %v520
    %v522 = vrot.slane %v521, 2
    %v523 = vadd.f32 %v521, %v522
    %v524 = vrot.slane %v523, 1
    %v525 = vadd.f32 %v523, %v524
    %v526 = vmul.f32 %v518, 0.00390625
    %v527 = vmul.f32 %v525, 0.00390625
    %v528 = vsub.f32 %v460, %v526
    %v529 = vsub.f32 %v461, %v526
    %v530 = vsub.f32 %v462, %v527
    %v531 = vsub.f32 %v463, %v527
    %v532 = vmul.f32 %v528, %v528
    %v533 = vmul.f32 %v529, %v529
    %v534 = vmul.f32 %v530, %v530
    %v535 = vmul.f32 %v531, %v531
    %536 = vrot.lane.b32.xlu0 %v532, 8
    %v537 = vpop.permute.xlu0 %536
    %538 = vrot.lane.b32.xlu0 %v533, 8
    %v539 = vpop.permute.xlu0 %538
    %540 = vrot.lane.b32.xlu0 %v534, 8
    %v541 = vpop.permute.xlu0 %540
    %542 = vrot.lane.b32.xlu0 %v535, 8
    %v543 = vpop.permute.xlu0 %542
    %v544 = vadd.f32 %v532, %v537
    %v545 = vadd.f32 %v533, %v539
    %v546 = vadd.f32 %v534, %v541
    %v547 = vadd.f32 %v535, %v543
    %548 = vrot.lane.b32.xlu0 %v544, 16
    %v549 = vpop.permute.xlu0 %548
    %550 = vrot.lane.b32.xlu0 %v545, 16
    %v551 = vpop.permute.xlu0 %550
    %552 = vrot.lane.b32.xlu0 %v546, 16
    %v553 = vpop.permute.xlu0 %552
    %554 = vrot.lane.b32.xlu0 %v547, 16
    %v555 = vpop.permute.xlu0 %554
    %v556 = vadd.f32 %v544, %v549
    %v557 = vadd.f32 %v545, %v551
    %v558 = vadd.f32 %v546, %v553
    %v559 = vadd.f32 %v547, %v555
    %560 = vrot.lane.b32.xlu0 %v556, 32
    %v561 = vpop.permute.xlu0 %560
    %562 = vrot.lane.b32.xlu0 %v557, 32
    %v563 = vpop.permute.xlu0 %562
    %564 = vrot.lane.b32.xlu0 %v558, 32
    %v565 = vpop.permute.xlu0 %564
    %566 = vrot.lane.b32.xlu0 %v559, 32
    %v567 = vpop.permute.xlu0 %566
    %v568 = vadd.f32 %v556, %v561
    %v569 = vadd.f32 %v557, %v563
    %v570 = vadd.f32 %v558, %v565
    %v571 = vadd.f32 %v559, %v567
    %572 = vrot.lane.b32.xlu0 %v568, 64
    %v573 = vpop.permute.xlu0 %572
    %574 = vrot.lane.b32.xlu0 %v569, 64
    %v575 = vpop.permute.xlu0 %574
    %576 = vrot.lane.b32.xlu0 %v570, 64
    %v577 = vpop.permute.xlu0 %576
    %578 = vrot.lane.b32.xlu0 %v571, 64
    %v579 = vpop.permute.xlu0 %578
    %v580 = vadd.f32 %v568, %v573
    %v581 = vadd.f32 %v569, %v575
    %v582 = vadd.f32 %v570, %v577
    %v583 = vadd.f32 %v571, %v579
    %v584 = vadd.f32 %v580, %v581
    %v585 = vrot.slane %v584, 4
    %v586 = vadd.f32 %v584, %v585
    %v587 = vrot.slane %v586, 2
    %v588 = vadd.f32 %v586, %v587
    %v589 = vrot.slane %v588, 1
    %v590 = vadd.f32 %v588, %v589
    %v591 = vadd.f32 %v582, %v583
    %v592 = vrot.slane %v591, 4
    %v593 = vadd.f32 %v591, %v592
    %v594 = vrot.slane %v593, 2
    %v595 = vadd.f32 %v593, %v594
    %v596 = vrot.slane %v595, 1
    %v597 = vadd.f32 %v595, %v596
    %v598 = vmul.f32 %v590, 0.00390625
    %v599 = vmul.f32 %v597, 0.00390625
    %v600 = vadd.f32 %v598, 1e-05
    %v601 = vadd.f32 %v599, 1e-05
    %v602 = vrsqrt.pop %v600
    %v603 = vrsqrt.pop %v601
    %v604 = vmul.f32 %v528, %v602
    %v605 = vmul.f32 %v529, %v602
    %v606 = vmul.f32 %v530, %v603
    %v607 = vmul.f32 %v531, %v603
    %v608 = vmax.f32 %v604, 0.0
    %v609 = vmax.f32 %v605, 0.0
    %v610 = vmax.f32 %v606, 0.0
    %v611 = vmax.f32 %v607, 0.0
    %612 = vst [vmem:[#allocation2 + $0x1] sm:$0xff] %v608
    %613 = vst [vmem:[#allocation2 + $0x9] sm:$0xff] %v609
    %614 = vst [vmem:[#allocation2 + $0x19] sm:$0xff] %v610
    %615 = vst [vmem:[#allocation2 + $0x21] sm:$0xff] %v611
    %v616 = vld [vmem:[#allocation2] sm:$0xff]
    %v617 = vld [vmem:[#allocation2 + $0x8] sm:$0xff]
    %v618 = vld [vmem:[#allocation2 + $0x10] sm:$0x3]
    %v619 = vld [vmem:[#allocation2 + $0x18] sm:$0xff]
    %v620 = vld [vmem:[#allocation2 + $0x20] sm:$0xff]
    %v621 = vld [vmem:[#allocation2 + $0x28] sm:$0x3]
    %v622 = vpack.c.bf16 %v617, %v616
    %v623 = vpack.c.bf16 %v618, %v618
    %v624 = vpack.c.bf16 %v620, %v619
    %v625 = vpack.c.bf16 %v621, %v621
    %v626 = vld [vmem:[#allocation8] sm:$0xf]
    %v627 = vld [vmem:[#allocation8 + $0x4] sm:$0xf]
    %v628 = vld [vmem:[#allocation8 + $0x8] sm:$0xf]
    %v629 = vld [vmem:[#allocation8 + $0xc] sm:$0xf]
    %v630 = vld [vmem:[#allocation8 + $0x10] sm:$0xf]
    %v631 = vld [vmem:[#allocation8 + $0x14] sm:$0xf]
    %v632 = vld [vmem:[#allocation8 + $0x18] sm:$0xf]
    %v633 = vld [vmem:[#allocation8 + $0x1c] sm:$0xf]
    %v634 = vld [vmem:[#allocation8 + $0x20] sm:$0xf]
    %v635 = vld [vmem:[#allocation8 + $0x24] sm:$0xf]
    %v636 = vld [vmem:[#allocation8 + $0x28] sm:$0xf]
    %v637 = vld [vmem:[#allocation8 + $0x2c] sm:$0xf]
    %v638 = vld [vmem:[#allocation8 + $0x30] sm:$0xf]
    %v639 = vld [vmem:[#allocation8 + $0x34] sm:$0xf]
    %v640 = vld [vmem:[#allocation8 + $0x38] sm:$0xf]
    %v641 = vld [vmem:[#allocation8 + $0x3c] sm:$0xf]
    %v643 = vshrl.u32 %v622, 16
    %v645 = vshll.u32 %v622, 16
    %v647 = vrot.slane %v645, 1
    %v648 = vor.u32 %v643, %v647
    %v650 = vshll.u32 %v623, 16
    %v652 = vrot.slane %v650, 1
    %v653 = vsel %vm95, %v648, %v652
    %v655 = vshrl.u32 %v624, 16
    %v657 = vshll.u32 %v624, 16
    %v659 = vrot.slane %v657, 1
    %v660 = vor.u32 %v655, %v659
    %v662 = vshll.u32 %v625, 16
    %v664 = vrot.slane %v662, 1
    %v665 = vsel %vm95, %v660, %v664
    %s668 = scalar_lea.vmem [#allocation8], 64
    %v669 = vld [vmem:[%s668] sm:$0xf]
    %v670 = vld [vmem:[%s668 + $0x4] sm:$0xf]
    %v671 = vld [vmem:[%s668 + $0x8] sm:$0xf]
    %v672 = vld [vmem:[%s668 + $0xc] sm:$0xf]
    %v673 = vld [vmem:[%s668 + $0x10] sm:$0xf]
    %v674 = vld [vmem:[%s668 + $0x14] sm:$0xf]
    %v675 = vld [vmem:[%s668 + $0x18] sm:$0xf]
    %v676 = vld [vmem:[%s668 + $0x1c] sm:$0xf]
    %v677 = vld [vmem:[%s668 + $0x20] sm:$0xf]
    %v678 = vld [vmem:[%s668 + $0x24] sm:$0xf]
    %v679 = vld [vmem:[%s668 + $0x28] sm:$0xf]
    %v680 = vld [vmem:[%s668 + $0x2c] sm:$0xf]
    %v681 = vld [vmem:[%s668 + $0x30] sm:$0xf]
    %v682 = vld [vmem:[%s668 + $0x34] sm:$0xf]
    %v683 = vld [vmem:[%s668 + $0x38] sm:$0xf]
    %v684 = vld [vmem:[%s668 + $0x3c] sm:$0xf]
    %v701 = vunpack.c.l.b16 %v669
    %v702 = vunpack.c.l.b16 %v670
    %v703 = vunpack.c.l.b16 %v671
    %v704 = vunpack.c.l.b16 %v672
    %v705 = vunpack.c.l.b16 %v673
    %v706 = vunpack.c.l.b16 %v674
    %v707 = vunpack.c.l.b16 %v675
    %v708 = vunpack.c.l.b16 %v676
    %v709 = vunpack.c.l.b16 %v677
    %v710 = vunpack.c.l.b16 %v678
    %v711 = vunpack.c.l.b16 %v679
    %v712 = vunpack.c.l.b16 %v680
    %v713 = vunpack.c.l.b16 %v681
    %v714 = vunpack.c.l.b16 %v682
    %v715 = vunpack.c.l.b16 %v683
    %v716 = vunpack.c.l.b16 %v684
    %v717 = vpack.c.b16 %v702, %v701
    %v718 = vpack.c.b16 %v704, %v703
    %v719 = vpack.c.b16 %v706, %v705
    %v720 = vpack.c.b16 %v708, %v707
    %v721 = vpack.c.b16 %v710, %v709
    %v722 = vpack.c.b16 %v712, %v711
    %v723 = vpack.c.b16 %v714, %v713
    %v724 = vpack.c.b16 %v716, %v715
    %733 = vmatprep.subr.bf16.mxu0 0
    %734 = vmatpush1.bf16.msra.mxu0 %v717
    %735 = vmatprep.subr.bf16.mxu0 0
    %736 = vmatpush1.bf16.msra.mxu0 %v718
    %737 = vmatprep.subr.bf16.mxu0 0
    %738 = vmatpush1.bf16.msra.mxu0 %v719
    %739 = vmatprep.subr.bf16.mxu0 0
    %740 = vmatpush1.bf16.msra.mxu0 %v720
    %741 = vmatprep.subr.bf16.mxu0 0
    %742 = vmatpush1.bf16.msra.mxu0 %v721
    %743 = vmatprep.subr.bf16.mxu0 0
    %744 = vmatpush1.bf16.msra.mxu0 %v722
    %745 = vmatprep.subr.bf16.mxu0 0
    %746 = vmatpush1.bf16.msra.mxu0 %v723
    %747 = vmatprep.subr.bf16.mxu0 0
    %748 = vmatpush1.bf16.msra.mxu0 %v724
    %749 = vmatprep.subr.bf16.mxu0 0
    %750 = vmatpush1.bf16.msra.mxu0 0
    %751 = vmatprep.subr.bf16.mxu0 0
    %752 = vmatpush1.bf16.msra.mxu0 0
    %753 = vmatprep.subr.bf16.mxu0 0
    %754 = vmatpush1.bf16.msra.mxu0 0
    %755 = vmatprep.subr.bf16.mxu0 0
    %756 = vmatpush1.bf16.msra.mxu0 0
    %757 = vmatprep.subr.bf16.mxu0 0
    %758 = vmatpush1.bf16.msra.mxu0 0
    %759 = vmatprep.subr.bf16.mxu0 0
    %760 = vmatpush1.bf16.msra.mxu0 0
    %761 = vmatprep.subr.bf16.mxu0 0
    %762 = vmatpush1.bf16.msra.mxu0 0
    %763 = vmatprep.subr.bf16.mxu0 0
    %764 = vmatpush1.bf16.msra.mxu0 0
    %765 = vmatprep.mubr.bf16.mxu0 0
    %766 = vmatmul.mubr.bf16.gmra.mrb[0].mxu0 %v653
    %v767 = vpop.f32.mrb[0].mxu0
    %v768 = vadd.f32 0.0, %v767
    %v769 = vpop.f32.mrb[0].mxu0
    %v770 = vpop.f32.mrb[0].mxu0
    %v771 = vadd.f32 0.0, %v770
    %v772 = vpop.f32.mrb[0].mxu0
    %773 = vmatprep.mubr.bf16.mxu0 0
    %774 = vmatmul.mubr.bf16.gmra.mrb[0].mxu0 %v665
    %v775 = vpop.f32.mrb[0].mxu0
    %v776 = vadd.f32 0.0, %v775
    %v777 = vpop.f32.mrb[0].mxu0
    %v778 = vpop.f32.mrb[0].mxu0
    %v779 = vadd.f32 0.0, %v778
    %v780 = vpop.f32.mrb[0].mxu0
    %781 = vdwg.mxu0
    %v798 = vunpack.c.l.b16 %v626
    %v799 = vunpack.c.l.b16 %v627
    %v800 = vunpack.c.l.b16 %v628
    %v801 = vunpack.c.l.b16 %v629
    %v802 = vunpack.c.l.b16 %v630
    %v803 = vunpack.c.l.b16 %v631
    %v804 = vunpack.c.l.b16 %v632
    %v805 = vunpack.c.l.b16 %v633
    %v806 = vunpack.c.l.b16 %v634
    %v807 = vunpack.c.l.b16 %v635
    %v808 = vunpack.c.l.b16 %v636
    %v809 = vunpack.c.l.b16 %v637
    %v810 = vunpack.c.l.b16 %v638
    %v811 = vunpack.c.l.b16 %v639
    %v812 = vunpack.c.l.b16 %v640
    %v813 = vunpack.c.l.b16 %v641
    %v814 = vpack.c.b16 %v799, %v798
    %v815 = vpack.c.b16 %v801, %v800
    %v816 = vpack.c.b16 %v803, %v802
    %v817 = vpack.c.b16 %v805, %v804
    %v818 = vpack.c.b16 %v807, %v806
    %v819 = vpack.c.b16 %v809, %v808
    %v820 = vpack.c.b16 %v811, %v810
    %v821 = vpack.c.b16 %v813, %v812
    %830 = vmatprep.subr.bf16.mxu0 0
    %831 = vmatpush1.bf16.msra.mxu0 %v814
    %832 = vmatprep.subr.bf16.mxu0 0
    %833 = vmatpush1.bf16.msra.mxu0 %v815
    %834 = vmatprep.subr.bf16.mxu0 0
    %835 = vmatpush1.bf16.msra.mxu0 %v816
    %836 = vmatprep.subr.bf16.mxu0 0
    %837 = vmatpush1.bf16.msra.mxu0 %v817
    %838 = vmatprep.subr.bf16.mxu0 0
    %839 = vmatpush1.bf16.msra.mxu0 %v818
    %840 = vmatprep.subr.bf16.mxu0 0
    %841 = vmatpush1.bf16.msra.mxu0 %v819
    %842 = vmatprep.subr.bf16.mxu0 0
    %843 = vmatpush1.bf16.msra.mxu0 %v820
    %844 = vmatprep.subr.bf16.mxu0 0
    %845 = vmatpush1.bf16.msra.mxu0 %v821
    %846 = vmatprep.subr.bf16.mxu0 0
    %847 = vmatpush1.bf16.msra.mxu0 0
    %848 = vmatprep.subr.bf16.mxu0 0
    %849 = vmatpush1.bf16.msra.mxu0 0
    %850 = vmatprep.subr.bf16.mxu0 0
    %851 = vmatpush1.bf16.msra.mxu0 0
    %852 = vmatprep.subr.bf16.mxu0 0
    %853 = vmatpush1.bf16.msra.mxu0 0
    %854 = vmatprep.subr.bf16.mxu0 0
    %855 = vmatpush1.bf16.msra.mxu0 0
    %856 = vmatprep.subr.bf16.mxu0 0
    %857 = vmatpush1.bf16.msra.mxu0 0
    %858 = vmatprep.subr.bf16.mxu0 0
    %859 = vmatpush1.bf16.msra.mxu0 0
    %860 = vmatprep.subr.bf16.mxu0 0
    %861 = vmatpush1.bf16.msra.mxu0 0
    %862 = vmatprep.mubr.bf16.mxu0 0
    %863 = vmatmul.mubr.bf16.gmra.mrb[0].mxu0 %v622
    %v864 = vpop.f32.mrb[0].mxu0
    %v865 = vadd.f32 %v768, %v864
    %v866 = vpop.f32.mrb[0].mxu0
    %v867 = vpop.f32.mrb[0].mxu0
    %v868 = vadd.f32 %v771, %v867
    %v869 = vpop.f32.mrb[0].mxu0
    %870 = vmatprep.mubr.bf16.mxu0 0
    %871 = vmatmul.mubr.bf16.gmra.mrb[0].mxu0 %v624
    %v872 = vpop.f32.mrb[0].mxu0
    %v873 = vadd.f32 %v776, %v872
    %v874 = vpop.f32.mrb[0].mxu0
    %v875 = vpop.f32.mrb[0].mxu0
    %v876 = vadd.f32 %v779, %v875
    %v877 = vpop.f32.mrb[0].mxu0
    %878 = vdwg.mxu0
    %v883 = vrot.slane %v622, 1
    %v884 = vrot.slane %v623, 1
    %v885 = vsel %vm337, %v883, %v884
    %v886 = vrot.slane %v624, 1
    %v887 = vrot.slane %v625, 1
    %v888 = vsel %vm337, %v886, %v887
    %s891 = scalar_lea.vmem [#allocation8], 128
    %v892 = vld [vmem:[%s891] sm:$0xf]
    %v893 = vld [vmem:[%s891 + $0x4] sm:$0xf]
    %v894 = vld [vmem:[%s891 + $0x8] sm:$0xf]
    %v895 = vld [vmem:[%s891 + $0xc] sm:$0xf]
    %v896 = vld [vmem:[%s891 + $0x10] sm:$0xf]
    %v897 = vld [vmem:[%s891 + $0x14] sm:$0xf]
    %v898 = vld [vmem:[%s891 + $0x18] sm:$0xf]
    %v899 = vld [vmem:[%s891 + $0x1c] sm:$0xf]
    %v900 = vld [vmem:[%s891 + $0x20] sm:$0xf]
    %v901 = vld [vmem:[%s891 + $0x24] sm:$0xf]
    %v902 = vld [vmem:[%s891 + $0x28] sm:$0xf]
    %v903 = vld [vmem:[%s891 + $0x2c] sm:$0xf]
    %v904 = vld [vmem:[%s891 + $0x30] sm:$0xf]
    %v905 = vld [vmem:[%s891 + $0x34] sm:$0xf]
    %v906 = vld [vmem:[%s891 + $0x38] sm:$0xf]
    %v907 = vld [vmem:[%s891 + $0x3c] sm:$0xf]
    %v924 = vunpack.c.l.b16 %v892
    %v925 = vunpack.c.l.b16 %v893
    %v926 = vunpack.c.l.b16 %v894
    %v927 = vunpack.c.l.b16 %v895
    %v928 = vunpack.c.l.b16 %v896
    %v929 = vunpack.c.l.b16 %v897
    %v930 = vunpack.c.l.b16 %v898
    %v931 = vunpack.c.l.b16 %v899
    %v932 = vunpack.c.l.b16 %v900
    %v933 = vunpack.c.l.b16 %v901
    %v934 = vunpack.c.l.b16 %v902
    %v935 = vunpack.c.l.b16 %v903
    %v936 = vunpack.c.l.b16 %v904
    %v937 = vunpack.c.l.b16 %v905
    %v938 = vunpack.c.l.b16 %v906
    %v939 = vunpack.c.l.b16 %v907
    %v940 = vpack.c.b16 %v925, %v924
    %v941 = vpack.c.b16 %v927, %v926
    %v942 = vpack.c.b16 %v929, %v928
    %v943 = vpack.c.b16 %v931, %v930
    %v944 = vpack.c.b16 %v933, %v932
    %v945 = vpack.c.b16 %v935, %v934
    %v946 = vpack.c.b16 %v937, %v936
    %v947 = vpack.c.b16 %v939, %v938
    %956 = vmatprep.subr.bf16.mxu0 0
    %957 = vmatpush1.bf16.msra.mxu0 %v940
    %958 = vmatprep.subr.bf16.mxu0 0
    %959 = vmatpush1.bf16.msra.mxu0 %v941
    %960 = vmatprep.subr.bf16.mxu0 0
    %961 = vmatpush1.bf16.msra.mxu0 %v942
    %962 = vmatprep.subr.bf16.mxu0 0
    %963 = vmatpush1.bf16.msra.mxu0 %v943
    %964 = vmatprep.subr.bf16.mxu0 0
    %965 = vmatpush1.bf16.msra.mxu0 %v944
    %966 = vmatprep.subr.bf16.mxu0 0
    %967 = vmatpush1.bf16.msra.mxu0 %v945
    %968 = vmatprep.subr.bf16.mxu0 0
    %969 = vmatpush1.bf16.msra.mxu0 %v946
    %970 = vmatprep.subr.bf16.mxu0 0
    %971 = vmatpush1.bf16.msra.mxu0 %v947
    %972 = vmatprep.subr.bf16.mxu0 0
    %973 = vmatpush1.bf16.msra.mxu0 0
    %974 = vmatprep.subr.bf16.mxu0 0
    %975 = vmatpush1.bf16.msra.mxu0 0
    %976 = vmatprep.subr.bf16.mxu0 0
    %977 = vmatpush1.bf16.msra.mxu0 0
    %978 = vmatprep.subr.bf16.mxu0 0
    %979 = vmatpush1.bf16.msra.mxu0 0
    %980 = vmatprep.subr.bf16.mxu0 0
    %981 = vmatpush1.bf16.msra.mxu0 0
    %982 = vmatprep.subr.bf16.mxu0 0
    %983 = vmatpush1.bf16.msra.mxu0 0
    %984 = vmatprep.subr.bf16.mxu0 0
    %985 = vmatpush1.bf16.msra.mxu0 0
    %986 = vmatprep.subr.bf16.mxu0 0
    %987 = vmatpush1.bf16.msra.mxu0 0
    %988 = vmatprep.mubr.bf16.mxu0 0
    %989 = vmatmul.mubr.bf16.gmra.mrb[0].mxu0 %v885
    %v990 = vpop.f32.mrb[0].mxu0
    %v991 = vadd.f32 0.0, %v990
    %v992 = vpop.f32.mrb[0].mxu0
    %v993 = vpop.f32.mrb[0].mxu0
    %v994 = vadd.f32 0.0, %v993
    %v995 = vpop.f32.mrb[0].mxu0
    %996 = vmatprep.mubr.bf16.mxu0 0
    %997 = vmatmul.mubr.bf16.gmra.mrb[0].mxu0 %v888
    %v998 = vpop.f32.mrb[0].mxu0
    %v999 = vadd.f32 0.0, %v998
    %v1000 = vpop.f32.mrb[0].mxu0
    %v1001 = vpop.f32.mrb[0].mxu0
    %v1002 = vadd.f32 0.0, %v1001
    %v1003 = vpop.f32.mrb[0].mxu0
    %1004 = vdwg.mxu0
    %v1005 = vadd.f32 %v865, %v991
    %v1006 = vadd.f32 %v868, %v994
    %v1007 = vadd.f32 %v873, %v999
    %v1008 = vadd.f32 %v876, %v1002
    %1009 = vrot.lane.b32.xlu0 %v1005, 8
    %v1010 = vpop.permute.xlu0 %1009
    %1011 = vrot.lane.b32.xlu0 %v1006, 8
    %v1012 = vpop.permute.xlu0 %1011
    %1013 = vrot.lane.b32.xlu0 %v1007, 8
    %v1014 = vpop.permute.xlu0 %1013
    %1015 = vrot.lane.b32.xlu0 %v1008, 8
    %v1016 = vpop.permute.xlu0 %1015
    %v1017 = vadd.f32 %v1005, %v1010
    %v1018 = vadd.f32 %v1006, %v1012
    %v1019 = vadd.f32 %v1007, %v1014
    %v1020 = vadd.f32 %v1008, %v1016
    %1021 = vrot.lane.b32.xlu0 %v1017, 16
    %v1022 = vpop.permute.xlu0 %1021
    %1023 = vrot.lane.b32.xlu0 %v1018, 16
    %v1024 = vpop.permute.xlu0 %1023
    %1025 = vrot.lane.b32.xlu0 %v1019, 16
    %v1026 = vpop.permute.xlu0 %1025
    %1027 = vrot.lane.b32.xlu0 %v1020, 16
    %v1028 = vpop.permute.xlu0 %1027
    %v1029 = vadd.f32 %v1017, %v1022
    %v1030 = vadd.f32 %v1018, %v1024
    %v1031 = vadd.f32 %v1019, %v1026
    %v1032 = vadd.f32 %v1020, %v1028
    %1033 = vrot.lane.b32.xlu0 %v1029, 32
    %v1034 = vpop.permute.xlu0 %1033
    %1035 = vrot.lane.b32.xlu0 %v1030, 32
    %v1036 = vpop.permute.xlu0 %1035
    %1037 = vrot.lane.b32.xlu0 %v1031, 32
    %v1038 = vpop.permute.xlu0 %1037
    %1039 = vrot.lane.b32.xlu0 %v1032, 32
    %v1040 = vpop.permute.xlu0 %1039
    %v1041 = vadd.f32 %v1029, %v1034
    %v1042 = vadd.f32 %v1030, %v1036
    %v1043 = vadd.f32 %v1031, %v1038
    %v1044 = vadd.f32 %v1032, %v1040
    %1045 = vrot.lane.b32.xlu0 %v1041, 64
    %v1046 = vpop.permute.xlu0 %1045
    %1047 = vrot.lane.b32.xlu0 %v1042, 64
    %v1048 = vpop.permute.xlu0 %1047
    %1049 = vrot.lane.b32.xlu0 %v1043, 64
    %v1050 = vpop.permute.xlu0 %1049
    %1051 = vrot.lane.b32.xlu0 %v1044, 64
    %v1052 = vpop.permute.xlu0 %1051
    %v1053 = vadd.f32 %v1041, %v1046
    %v1054 = vadd.f32 %v1042, %v1048
    %v1055 = vadd.f32 %v1043, %v1050
    %v1056 = vadd.f32 %v1044, %v1052
    %v1057 = vadd.f32 %v1053, %v1054
    %v1058 = vrot.slane %v1057, 4
    %v1059 = vadd.f32 %v1057, %v1058
    %v1060 = vrot.slane %v1059, 2
    %v1061 = vadd.f32 %v1059, %v1060
    %v1062 = vrot.slane %v1061, 1
    %v1063 = vadd.f32 %v1061, %v1062
    %v1064 = vadd.f32 %v1055, %v1056
    %v1065 = vrot.slane %v1064, 4
    %v1066 = vadd.f32 %v1064, %v1065
    %v1067 = vrot.slane %v1066, 2
    %v1068 = vadd.f32 %v1066, %v1067
    %v1069 = vrot.slane %v1068, 1
    %v1070 = vadd.f32 %v1068, %v1069
    %v1071 = vmul.f32 %v1063, 0.00390625
    %v1072 = vmul.f32 %v1070, 0.00390625
    %v1073 = vsub.f32 %v1005, %v1071
    %v1074 = vsub.f32 %v1006, %v1071
    %v1075 = vsub.f32 %v1007, %v1072
    %v1076 = vsub.f32 %v1008, %v1072
    %v1077 = vmul.f32 %v1073, %v1073
    %v1078 = vmul.f32 %v1074, %v1074
    %v1079 = vmul.f32 %v1075, %v1075
    %v1080 = vmul.f32 %v1076, %v1076
    %1081 = vrot.lane.b32.xlu0 %v1077, 8
    %v1082 = vpop.permute.xlu0 %1081
    %1083 = vrot.lane.b32.xlu0 %v1078, 8
    %v1084 = vpop.permute.xlu0 %1083
    %1085 = vrot.lane.b32.xlu0 %v1079, 8
    %v1086 = vpop.permute.xlu0 %1085
    %1087 = vrot.lane.b32.xlu0 %v1080, 8
    %v1088 = vpop.permute.xlu0 %1087
    %v1089 = vadd.f32 %v1077, %v1082
    %v1090 = vadd.f32 %v1078, %v1084
    %v1091 = vadd.f32 %v1079, %v1086
    %v1092 = vadd.f32 %v1080, %v1088
    %1093 = vrot.lane.b32.xlu0 %v1089, 16
    %v1094 = vpop.permute.xlu0 %1093
    %1095 = vrot.lane.b32.xlu0 %v1090, 16
    %v1096 = vpop.permute.xlu0 %1095
    %1097 = vrot.lane.b32.xlu0 %v1091, 16
    %v1098 = vpop.permute.xlu0 %1097
    %1099 = vrot.lane.b32.xlu0 %v1092, 16
    %v1100 = vpop.permute.xlu0 %1099
    %v1101 = vadd.f32 %v1089, %v1094
    %v1102 = vadd.f32 %v1090, %v1096
    %v1103 = vadd.f32 %v1091, %v1098
    %v1104 = vadd.f32 %v1092, %v1100
    %1105 = vrot.lane.b32.xlu0 %v1101, 32
    %v1106 = vpop.permute.xlu0 %1105
    %1107 = vrot.lane.b32.xlu0 %v1102, 32
    %v1108 = vpop.permute.xlu0 %1107
    %1109 = vrot.lane.b32.xlu0 %v1103, 32
    %v1110 = vpop.permute.xlu0 %1109
    %1111 = vrot.lane.b32.xlu0 %v1104, 32
    %v1112 = vpop.permute.xlu0 %1111
    %v1113 = vadd.f32 %v1101, %v1106
    %v1114 = vadd.f32 %v1102, %v1108
    %v1115 = vadd.f32 %v1103, %v1110
    %v1116 = vadd.f32 %v1104, %v1112
    %1117 = vrot.lane.b32.xlu0 %v1113, 64
    %v1118 = vpop.permute.xlu0 %1117
    %1119 = vrot.lane.b32.xlu0 %v1114, 64
    %v1120 = vpop.permute.xlu0 %1119
    %1121 = vrot.lane.b32.xlu0 %v1115, 64
    %v1122 = vpop.permute.xlu0 %1121
    %1123 = vrot.lane.b32.xlu0 %v1116, 64
    %v1124 = vpop.permute.xlu0 %1123
    %v1125 = vadd.f32 %v1113, %v1118
    %v1126 = vadd.f32 %v1114, %v1120
    %v1127 = vadd.f32 %v1115, %v1122
    %v1128 = vadd.f32 %v1116, %v1124
    %v1129 = vadd.f32 %v1125, %v1126
    %v1130 = vrot.slane %v1129, 4
    %v1131 = vadd.f32 %v1129, %v1130
    %v1132 = vrot.slane %v1131, 2
    %v1133 = vadd.f32 %v1131, %v1132
    %v1134 = vrot.slane %v1133, 1
    %v1135 = vadd.f32 %v1133, %v1134
    %v1136 = vadd.f32 %v1127, %v1128
    %v1137 = vrot.slane %v1136, 4
    %v1138 = vadd.f32 %v1136, %v1137
    %v1139 = vrot.slane %v1138, 2
    %v1140 = vadd.f32 %v1138, %v1139
    %v1141 = vrot.slane %v1140, 1
    %v1142 = vadd.f32 %v1140, %v1141
    %v1143 = vmul.f32 %v1135, 0.00390625
    %v1144 = vmul.f32 %v1142, 0.00390625
    %v1145 = vadd.f32 %v1143, 1e-05
    %v1146 = vadd.f32 %v1144, 1e-05
    %v1147 = vrsqrt.pop %v1145
    %v1148 = vrsqrt.pop %v1146
    %v1149 = vmul.f32 %v1073, %v1147
    %v1150 = vmul.f32 %v1074, %v1147
    %v1151 = vmul.f32 %v1075, %v1148
    %v1152 = vmul.f32 %v1076, %v1148
    %v1153 = vadd.f32 %v1149, %v61
    %v1154 = vadd.f32 %v1150, %v62
    %v1155 = vadd.f32 %v1151, %v63
    %v1156 = vadd.f32 %v1152, %v64
    %1157 = vst [vmem:[#allocation9] sm:$0xff] %v1153
    %1158 = vst [vmem:[#allocation9 + $0x8] sm:$0xff] %v1154
    %1159 = vst [vmem:[#allocation9 + $0x10] sm:$0xff] %v1155
    %1160 = vst [vmem:[#allocation9 + $0x18] sm:$0xff] %v1156
    // Predicated region
    $region26: #{tpu_custom_call.1} parent=1 // pred_check
      _
    $region27: #{tpu_custom_call.1} parent=1 // pred_check_branch
      %1162 = sbr.rel (0) target = $region29
    $region28: #{tpu_custom_call.1} parent=1 // pred_region
      %s1164 = ssub.s32 512, 512
      %1165 = vsyncadd [#allocation5], %s1164
      %s1166 = sshll.u32 [#allocation9], 4
      %s1167 = int_to_ptr.vmem [resolvable:$true] %s1166
      %1172 = dma.vmem_to_hbm [thread:$0]  %s1167, 512, %s3, [#allocation5], 128, 128, 8
    $region29: #{tpu_custom_call.1} parent=1 // pred_fallthru
      _
    // Predicated region
    $region30: #{tpu_custom_call.1} parent=1 // pred_check
      _
    $region31: #{tpu_custom_call.1} parent=1 // pred_check_branch
      %1174 = sbr.rel (0) target = $region33
    $region32: #{tpu_custom_call.1} parent=1 // pred_region
      %1175 = dma.done [#allocation5], 512
    $region33: #{tpu_custom_call.1} parent=1 // pred_fallthru
      _
    %1176 = vsyncpa [#allocation4], 1
    %1177 = vsyncpa [#allocation7], 1
    %1178 = vsyncpa [#allocation5], 1

</llo_original>
